<compile_context>
chip_gen: v6e
topology: v6e:2x2x1
jax: 0.10.0
libtpu: 0.0.40
codegen_flags: <defaults>
</compile_context>

<pallas_src>
import functools

import jax
import jax.numpy as jnp
from jax import lax
from jax.experimental import pallas as pl
from jax.experimental.pallas import tpu as pltpu

_MIB = 1024 * 1024
_FAST_PATH_BYTES = 12 * _MIB    # single-block path budget (fits v5e's 16 MiB scoped default)
_ROWS_PATH_BYTES = 40 * _MIB    # weight-resident budget (fits v7x's 64 MiB physical per TC)
_VMEM_LIMIT_CAP = 60 * _MIB


# --------------------------------------------------------------------------- #
# Kernels
# --------------------------------------------------------------------------- #
def _encoder_block_kernel(x_ref, w_ref, o_ref, *, apply_relu):
    """One-shot kernel: x:[m,K] , w:[N,K] -> o:[m,N] (single & rows paths)."""
    acc = lax.dot_general(
        x_ref[...], w_ref[...],
        dimension_numbers=(((1,), (1,)), ((), ())),   # contract K of both (trans_b)
        preferred_element_type=jnp.float32,
    )
    if apply_relu:
        acc = jnp.maximum(acc, 0.0)
    o_ref[...] = acc.astype(o_ref.dtype)


def _masked_k(k, nk, k_rem, x, w):
    """Zero the garbage tail columns of the (static) ragged last K tile."""
    if not k_rem:                      # static: K divides evenly, no masking
        return x, w
    not_last = k != nk - 1
    colx = lax.broadcasted_iota(jnp.int32, x.shape, 1)
    colw = lax.broadcasted_iota(jnp.int32, w.shape, 1)
    x = jnp.where(jnp.logical_or(not_last, colx < k_rem), x, 0)
    w = jnp.where(jnp.logical_or(not_last, colw < k_rem), w, 0)
    return x, w


def _encoder_tiled_f32out_kernel(x_ref, w_ref, o_ref, *, apply_relu, k_rem):
    """Tiled K-reduction, f32 output: accumulate directly into the resident o block."""
    k = pl.program_id(2)
    nk = pl.num_programs(2)
    x, w = _masked_k(k, nk, k_rem, x_ref[...], w_ref[...])
    part = lax.dot_general(
        x, w,
        dimension_numbers=(((1,), (1,)), ((), ())),
        preferred_element_type=jnp.float32,
    )

    @pl.when(k == 0)
    def _():
        o_ref[...] = part              # first step writes (no zero-fill + RMW)

    @pl.when(k != 0)
    def _():
        o_ref[...] += part

    if apply_relu:
        @pl.when(k == nk - 1)
        def _():
            o_ref[...] = jnp.maximum(o_ref[...], 0.0)


def _encoder_tiled_acc_kernel(x_ref, w_ref, o_ref, acc_ref, *, apply_relu, k_rem):
    """Tiled K-reduction with f32 scratch accumulator (non-f32 outputs)."""
    k = pl.program_id(2)
    nk = pl.num_programs(2)
    x, w = _masked_k(k, nk, k_rem, x_ref[...], w_ref[...])
    part = lax.dot_general(
        x, w,
        dimension_numbers=(((1,), (1,)), ((), ())),
        preferred_element_type=jnp.float32,
    )

    @pl.when(k == 0)
    def _():
        acc_ref[...] = part

    @pl.when(k != 0)
    def _():
        acc_ref[...] += part

    @pl.when(k == nk - 1)
    def _():
        acc = acc_ref[...]
        if apply_relu:
            acc = jnp.maximum(acc, 0.0)
        o_ref[...] = acc.astype(o_ref.dtype)


# --------------------------------------------------------------------------- #
# Tile selection helpers
# --------------------------------------------------------------------------- #
def _sublane_granule(dtype):
    """Native sublane packing multiple: 8 for f32, 16 for bf16, 32 for 8-bit."""
    return 8 * max(1, 4 // jnp.dtype(dtype).itemsize)


def _pick_tile(dim, pref, granule):
    """Largest tile <= pref that is a multiple of `granule`, or the full dim."""
    if dim <= pref:
        return dim                     # full-dim block is always layout-legal
    t = (pref // granule) * granule
    return max(t, granule)


def _pick_k_tile(K, pref):
    """K tile: multiple of 128 (ragged tail handled by in-kernel masking)."""
    if K <= pref or K < 128:
        return K
    t = max(128, (pref // 128) * 128)
    return min(t, (K // 128) * 128)


def _rows_tile(M, K, N, tm_pref, isz, wsz, osz, m_gran, budget):
    """Largest M tile so the weight-resident path fits `budget`, else (None, None)."""
    w_bytes = 2 * N * K * wsz          # conservative: assume double-buffered
    tm_eff = _pick_tile(M, tm_pref, m_gran)
    while True:
        fp = w_bytes + 2 * tm_eff * (K * isz + N * osz)
        if fp <= budget:
            return tm_eff, fp
        if tm_eff <= m_gran:
            return None, None
        tm_eff = max(m_gran, ((tm_eff // 2) // m_gran) * m_gran)


def _vmem_limit(footprint):
    return int(min(_VMEM_LIMIT_CAP, max(32 * _MIB, footprint + 4 * _MIB)))


# --------------------------------------------------------------------------- #
# Wrapper
# --------------------------------------------------------------------------- #
def _encoder_forward_2d(x, weight, *, linear, tm, tn, tk, force_path):
    M, K = x.shape
    N, Kw = weight.shape
    assert K == Kw, "in_feature mismatch"

    apply_relu = not linear
    out_dtype = x.dtype
    isz = jnp.dtype(x.dtype).itemsize
    wsz = jnp.dtype(weight.dtype).itemsize
    osz = jnp.dtype(out_dtype).itemsize
    m_gran = _sublane_granule(x.dtype)
    flops = 2 * M * K * N

    # ---------------- path selection (byte-footprint based) ----------------- #
    single_bytes = M * K * isz + N * K * wsz + M * N * osz
    rows_tm, rows_fp = _rows_tile(M, K, N, tm, isz, wsz, osz, m_gran,
                                  _ROWS_PATH_BYTES)

    path = force_path
    if path is None:
        if single_bytes <= _FAST_PATH_BYTES:
            path = "single"
        elif rows_tm is not None and (rows_tm == M or rows_tm >= 128):
            path = "rows"
        else:
            path = "tiled"
    if path == "rows" and rows_tm is None:
        path = "tiled"

    # ---------------- fast path: single block, no grid ---------------------- #
    if path == "single":
        cost = pl.CostEstimate(flops=flops, transcendentals=0,
                               bytes_accessed=single_bytes)
        kernel = functools.partial(_encoder_block_kernel, apply_relu=apply_relu)
        return pl.pallas_call(
            kernel,
            out_shape=jax.ShapeDtypeStruct((M, N), out_dtype),
            cost_estimate=cost,
        )(x, weight)

    # ---------------- rows path: weight resident, grid over M only ---------- #
    if path == "rows":
        cost = pl.CostEstimate(
            flops=flops, transcendentals=0,
            bytes_accessed=M * K * isz + N * K * wsz + M * N * osz)
        kernel = functools.partial(_encoder_block_kernel, apply_relu=apply_relu)
        return pl.pallas_call(
            kernel,
            out_shape=jax.ShapeDtypeStruct((M, N), out_dtype),
            grid=(pl.cdiv(M, rows_tm),),
            in_specs=[
                pl.BlockSpec((rows_tm, K), lambda i: (i, 0)),   # x rows
                pl.BlockSpec((N, K), lambda i: (0, 0)),         # weight: fetched once
            ],
            out_specs=pl.BlockSpec((rows_tm, N), lambda i: (i, 0)),
            compiler_params=pltpu.CompilerParams(
                dimension_semantics=("parallel",),
                vmem_limit_bytes=_vmem_limit(rows_fp),
            ),
            cost_estimate=cost,
        )(x, weight)

    # ---------------- general path: 3-D grid with K reduction --------------- #
    tm_eff = _pick_tile(M, tm, m_gran)          # dtype-aware sublane granule
    tn_eff = _pick_tile(N, tn, 128)             # lane-dense output tiles
    tk_eff = _pick_k_tile(K, tk)
    k_rem = K % tk_eff if tk_eff < K else 0     # static ragged K tail (masked)

    gm, gn, gk = pl.cdiv(M, tm_eff), pl.cdiv(N, tn_eff), pl.cdiv(K, tk_eff)

    direct_f32 = jnp.dtype(out_dtype) == jnp.dtype(jnp.float32)
    if direct_f32:
        kernel = functools.partial(_encoder_tiled_f32out_kernel,
                                   apply_relu=apply_relu, k_rem=k_rem)
        scratch_shapes = []
        acc_bytes = 0
    else:
        kernel = functools.partial(_encoder_tiled_acc_kernel,
                                   apply_relu=apply_relu, k_rem=k_rem)
        scratch_shapes = [pltpu.VMEM((tm_eff, tn_eff), jnp.float32)]
        acc_bytes = tm_eff * tn_eff * 4

    footprint = (2 * (tm_eff * tk_eff * isz + tn_eff * tk_eff * wsz
                      + tm_eff * tn_eff * osz) + acc_bytes)
    cost = pl.CostEstimate(
        flops=flops, transcendentals=0,
        bytes_accessed=M * K * isz * gn + N * K * wsz * gm + M * N * osz)

    return pl.pallas_call(
        kernel,
        out_shape=jax.ShapeDtypeStruct((M, N), out_dtype),
        grid=(gm, gn, gk),
        in_specs=[
            pl.BlockSpec((tm_eff, tk_eff), lambda i, j, k: (i, k)),   # x tile
            pl.BlockSpec((tn_eff, tk_eff), lambda i, j, k: (j, k)),   # weight tile
        ],
        out_specs=pl.BlockSpec((tm_eff, tn_eff), lambda i, j, k: (i, j)),
        scratch_shapes=scratch_shapes,
        compiler_params=pltpu.CompilerParams(
            dimension_semantics=("parallel", "parallel", "arbitrary"),
            vmem_limit_bytes=_vmem_limit(footprint),
        ),
        cost_estimate=cost,
    )(x, weight)


def encoder_forward(x, weight, *, linear=True, tm=512, tn=512, tk=512,
                    force_path=None):
    """Pallas equivalent of Encoder.forward.

    x:      [..., in_feature]
    weight: [embed, in_feature]   (PyTorch nn.Linear layout; NOT transposed)
    returns [..., embed]
    """
    orig_shape = x.shape
    if x.ndim != 2:
        x = x.reshape(-1, orig_shape[-1])
    out = _encoder_forward_2d(x, weight, linear=linear, tm=tm, tn=tn, tk=tk,
                              force_path=force_path)
    if len(orig_shape) != 2:
        out = out.reshape(*orig_shape[:-1], weight.shape[0])
    return out


def reference_forward(x, weight, *, linear=True):
    y = x @ weight.T
    if not linear:
        y = jnp.maximum(y, 0.0)
    return y


# --------------------------------------------------------------------------- #
# Demo / self-check
# --------------------------------------------------------------------------- #
if __name__ == "__main__":
    key = jax.random.PRNGKey(0)
    kx, kw, kx2, kw2 = jax.random.split(key, 4)

    # --- small shapes consistent with the module: batch=8, in_feature=32, embed=128
    batch, in_feature, embed = 8, 32, 128
    x = jax.random.normal(kx, (batch, in_feature), dtype=jnp.float32)
    weight = jax.random.normal(kw, (embed, in_feature), dtype=jnp.float32) * 0.05

    # linear=True path (default): pure matmul (single-block fast path)
    y = encoder_forward(x, weight, linear=True)
    jax.block_until_ready(y)
    assert jnp.allclose(y, reference_forward(x, weight, linear=True),
                        atol=1e-4, rtol=1e-4), "linear path mismatch"

    # linear=False path: matmul + fused ReLU
    y2 = encoder_forward(x, weight, linear=False)
    jax.block_until_ready(y2)
    assert jnp.allclose(y2, reference_forward(x, weight, linear=False),
                        atol=1e-4, rtol=1e-4), "relu path mismatch"

    # --- moderate shapes: exercise the tiled 3-D grid path with a ragged K tail
    # (576 % 128 == 64 -> in-kernel tail masking) and direct-f32 accumulation.
    M2, K2, N2 = 384, 576, 384
    x_big = jax.random.normal(kx2, (M2, K2), dtype=jnp.float32)
    w_big = jax.random.normal(kw2, (N2, K2), dtype=jnp.float32) * 0.02
    ref_big = reference_forward(x_big, w_big, linear=False)

    y3 = encoder_forward(x_big, w_big, linear=False,
                         tm=128, tn=128, tk=128, force_path="tiled")
    jax.block_until_ready(y3)
    assert jnp.allclose(y3, ref_big, atol=1e-3, rtol=1e-3), "tiled path mismatch"

    # --- weight-resident path (grid over M only, weight DMA'd once)
    y4 = encoder_forward(x_big, w_big, linear=False, tm=128, force_path="rows")
    jax.block_until_ready(y4)
    assert jnp.allclose(y4, ref_big, atol=1e-3, rtol=1e-3), "rows path mismatch"

    # --- bf16 inputs: exercises the f32-scratch accumulator + cast writeback
    x_bf = x_big.astype(jnp.bfloat16)
    w_bf = w_big.astype(jnp.bfloat16)
    ref_bf = jnp.maximum(x_bf.astype(jnp.float32) @ w_bf.astype(jnp.float32).T, 0.0)
    y5 = encoder_forward(x_bf, w_bf, linear=False,
                         tm=128, tn=128, tk=128, force_path="tiled")
    jax.block_until_ready(y5)
    assert jnp.allclose(y5.astype(jnp.float32), ref_bf,
                        atol=3e-2, rtol=3e-2), "bf16 tiled path mismatch"

    print("KERNEL_OK")
</pallas_src>

<mosaic_0001>
module attributes {stable_mosaic.version = 11 : i64} {
  func.func @_encoder_block_kernel(%arg0: memref<8x32xf32, #tpu.memory_space<vmem>>, %arg1: memref<128x32xf32, #tpu.memory_space<vmem>>, %arg2: memref<8x128xf32, #tpu.memory_space<vmem>>) attributes {dimension_semantics = [], scalar_prefetch = 0 : i64, scratch_operands = 0 : i64, tpu.core_type = #tpu.core_type<tc>} {
    %c0 = arith.constant 0 : index
    %c0_0 = arith.constant 0 : index
    %0 = vector.load %arg0[%c0, %c0_0] : memref<8x32xf32, #tpu.memory_space<vmem>>, vector<8x32xf32>
    %c0_1 = arith.constant 0 : index
    %c0_2 = arith.constant 0 : index
    %1 = vector.load %arg1[%c0_1, %c0_2] : memref<128x32xf32, #tpu.memory_space<vmem>>, vector<128x32xf32>
    %cst = arith.constant dense<0.000000e+00> : vector<8x128xf32>
    %2 = tpu.matmul %0, %1, %cst {dimension_numbers = #tpu.dot_dimension_numbers<[1], [1], [0], [0], [0, 0, 1, 0], [], []>} : vector<8x32xf32>, vector<128x32xf32>, vector<8x128xf32> -> vector<8x128xf32>
    %c0_3 = arith.constant 0 : index
    %c0_4 = arith.constant 0 : index
    %3 = vector.load %arg2[%c0_3, %c0_4] : memref<8x128xf32, #tpu.memory_space<vmem>>, vector<8x128xf32>
    tpu.vector_store %arg2[%c0_3, %c0_4], %2 {strides = array<i32>} : memref<8x128xf32, #tpu.memory_space<vmem>>, vector<8x128xf32>,
    return
  }
}

</mosaic_0001>

<llo_original>
// kernel: tpu_custom_call.1
$region0: #{tpu_custom_call.1}
  #allocation0 [shape = 'u32[]', space=smem, size = 0x4, offset = 0x4, fixed_abs, tag = 'smem constant byte address 0x4 - core index']
  #allocation1 [shape = 'u32[144,128]{1,0:T(1,128)}', space=vmem, size = 0x12000, scoped, tag = 'internal scratch']
  %s0 = inlined_call_operand.vmem [shape: f32[8,32], index: 0, kind: input, shape index: {}]
  %s1 = inlined_call_operand.vmem [shape: f32[128,32], index: 1, kind: input, shape index: {}]
  %s2 = inlined_call_operand.hbm [shape: f32[8,128], index: 2, kind: output, shape index: {}]
  %s3 = sld [smem:[#allocation0]]
  $region18: #{tpu_custom_call.1} parent=0
    _
  %s5 = ssub.s32 1, %s3
  %s6 = scalar_select 0, %s5, %s3
  $region1: #{tpu_custom_call.1} parent=0
    #allocation2 [shape = 'u8[4096]{0}', space=vmem, size = 0x1000, scoped, tag = 'output window, operand 0, single buffered']
    #allocation3 [shape = 's32[1]{0}', space=sflag, size = 0x4, scoped, tag = 'scoped memory for tpu_custom_call.1']
    %7 = vsyncpa [#allocation3], 0
    // Predicated region
    $region2: #{tpu_custom_call.1} parent=1 // pred_check
      _
    $region3: #{tpu_custom_call.1} parent=1 // pred_check_branch
      %9 = sbr.rel (0) target = $region5
    $region4: #{tpu_custom_call.1} parent=1 // pred_region
      _
    $region5: #{tpu_custom_call.1} parent=1 // pred_fallthru
      _
    // Predicated region
    $region6: #{tpu_custom_call.1} parent=1 // pred_check
      _
    $region7: #{tpu_custom_call.1} parent=1 // pred_check_branch
      %11 = sbr.rel (0) target = $region9
    $region8: #{tpu_custom_call.1} parent=1 // pred_region
      _
    $region9: #{tpu_custom_call.1} parent=1 // pred_fallthru
      _
    %v12 = vld [vmem:[%s0] sm:$0xff]
    %v13 = vld [vmem:[%s1] sm:$0xff]
    %v14 = vld [vmem:[%s1 + $0x8] sm:$0xff]
    %v15 = vld [vmem:[%s1 + $0x10] sm:$0xff]
    %v16 = vld [vmem:[%s1 + $0x18] sm:$0xff]
    %v17 = vld [vmem:[%s1 + $0x20] sm:$0xff]
    %v18 = vld [vmem:[%s1 + $0x28] sm:$0xff]
    %v19 = vld [vmem:[%s1 + $0x30] sm:$0xff]
    %v20 = vld [vmem:[%s1 + $0x38] sm:$0xff]
    %v21 = vld [vmem:[%s1 + $0x40] sm:$0xff]
    %v22 = vld [vmem:[%s1 + $0x48] sm:$0xff]
    %v23 = vld [vmem:[%s1 + $0x50] sm:$0xff]
    %v24 = vld [vmem:[%s1 + $0x58] sm:$0xff]
    %v25 = vld [vmem:[%s1 + $0x60] sm:$0xff]
    %v26 = vld [vmem:[%s1 + $0x68] sm:$0xff]
    %v27 = vld [vmem:[%s1 + $0x70] sm:$0xff]
    %v28 = vld [vmem:[%s1 + $0x78] sm:$0xff]
    %vm29 = vcmask 261120
    %v31 = vsel %vm29, %v12, 0
    %v34 = vsel %vm29, %v13, 0
    %v37 = vsel %vm29, %v14, 0
    %v40 = vsel %vm29, %v15, 0
    %v43 = vsel %vm29, %v16, 0
    %v46 = vsel %vm29, %v17, 0
    %v49 = vsel %vm29, %v18, 0
    %v52 = vsel %vm29, %v19, 0
    %v55 = vsel %vm29, %v20, 0
    %v58 = vsel %vm29, %v21, 0
    %v61 = vsel %vm29, %v22, 0
    %v64 = vsel %vm29, %v23, 0
    %v67 = vsel %vm29, %v24, 0
    %v70 = vsel %vm29, %v25, 0
    %v73 = vsel %vm29, %v26, 0
    %v76 = vsel %vm29, %v27, 0
    %v79 = vsel %vm29, %v28, 0
    %81 = vmatprep.subr.mxu0 0.0
    %82 = vmatpush1.xpose.msra.mxu0 %v79
    %83 = vmatprep.subr.mxu0 0.0
    %84 = vmatpush1.xpose.msra.mxu0 %v76
    %85 = vmatprep.subr.mxu0 0.0
    %86 = vmatpush1.xpose.msra.mxu0 %v73
    %87 = vmatprep.subr.mxu0 0.0
    %88 = vmatpush1.xpose.msra.mxu0 %v70
    %89 = vmatprep.subr.mxu0 0.0
    %90 = vmatpush1.xpose.msra.mxu0 %v67
    %91 = vmatprep.subr.mxu0 0.0
    %92 = vmatpush1.xpose.msra.mxu0 %v64
    %93 = vmatprep.subr.mxu0 0.0
    %94 = vmatpush1.xpose.msra.mxu0 %v61
    %95 = vmatprep.subr.mxu0 0.0
    %96 = vmatpush1.xpose.msra.mxu0 %v58
    %97 = vmatprep.subr.mxu0 0.0
    %98 = vmatpush1.xpose.msra.mxu0 %v55
    %99 = vmatprep.subr.mxu0 0.0
    %100 = vmatpush1.xpose.msra.mxu0 %v52
    %101 = vmatprep.subr.mxu0 0.0
    %102 = vmatpush1.xpose.msra.mxu0 %v49
    %103 = vmatprep.subr.mxu0 0.0
    %104 = vmatpush1.xpose.msra.mxu0 %v46
    %105 = vmatprep.subr.mxu0 0.0
    %106 = vmatpush1.xpose.msra.mxu0 %v43
    %107 = vmatprep.subr.mxu0 0.0
    %108 = vmatpush1.xpose.msra.mxu0 %v40
    %109 = vmatprep.subr.mxu0 0.0
    %110 = vmatpush1.xpose.msra.mxu0 %v37
    %111 = vmatprep.subr.mxu0 0.0
    %112 = vmatpush1.xpose.msra.mxu0 %v34
    %113 = vmatprep.subr.mxu0 0.0
    %114 = vmatpush2.xpose.msra.mxu0 0.0
    %115 = vmatprep.subr.mxu0 0.0
    %116 = vmatpush2.xpose.msra.mxu0 0.0
    %117 = vmatprep.subr.mxu0 0.0
    %118 = vmatpush2.xpose.msra.mxu0 0.0
    %119 = vmatprep.subr.mxu0 0.0
    %120 = vmatpush2.xpose.msra.mxu0 0.0
    %121 = vmatprep.subr.mxu0 0.0
    %122 = vmatpush2.xpose.msra.mxu0 0.0
    %123 = vmatprep.subr.mxu0 0.0
    %124 = vmatpush2.xpose.msra.mxu0 0.0
    %125 = vmatprep.subr.mxu0 0.0
    %126 = vmatpush2.xpose.msra.mxu0 0.0
    %127 = vmatprep.subr.mxu0 0.0
    %128 = vmatpush2.xpose.msra.mxu0 0.0
    %129 = vmatprep.subr.mxu0 0.0
    %130 = vmatpush2.xpose.msra.mxu0 0.0
    %131 = vmatprep.subr.mxu0 0.0
    %132 = vmatpush2.xpose.msra.mxu0 0.0
    %133 = vmatprep.subr.mxu0 0.0
    %134 = vmatpush2.xpose.msra.mxu0 0.0
    %135 = vmatprep.subr.mxu0 0.0
    %136 = vmatpush2.xpose.msra.mxu0 0.0
    %137 = vmatprep.subr.mxu0 0.0
    %138 = vmatpush2.xpose.msra.mxu0 0.0
    %139 = vmatprep.subr.mxu0 0.0
    %140 = vmatpush2.xpose.msra.mxu0 0.0
    %141 = vmatprep.subr.mxu0 0.0
    %142 = vmatpush2.xpose.msra.mxu0 0.0
    %143 = vmatprep.subr.mxu0 0.0
    %144 = vmatpush2.xpose.msra.mxu0 0.0
    %145 = vmatprep.mubr.f32.mxu0 0.0
    %146 = vmatmul.mubr.f32.gmra.mxu0 %v31
    %v147 = vpop.f32.mrf.mxu0
    %v148 = vadd.f32 0.0, %v147
    %v149 = vpop.f32.mrf.mxu0
    %150 = vdwg.mxu0
    %151 = vst [vmem:[#allocation2] sm:$0xff] %v148
    // Predicated region
    $region10: #{tpu_custom_call.1} parent=1 // pred_check
      _
    $region11: #{tpu_custom_call.1} parent=1 // pred_check_branch
      %153 = sbr.rel (0) target = $region13
    $region12: #{tpu_custom_call.1} parent=1 // pred_region
      %s155 = ssub.s32 128, 128
      %156 = vsyncadd [#allocation3], %s155
      %s158 = sshll.u32 [#allocation2], 4
      %s159 = int_to_ptr.vmem [resolvable:$true] %s158
      %161 = dma.vmem_to_hbm [thread:$0]  %s159, 128, %s2, [#allocation3]
    $region13: #{tpu_custom_call.1} parent=1 // pred_fallthru
      _
    // Predicated region
    $region14: #{tpu_custom_call.1} parent=1 // pred_check
      _
    $region15: #{tpu_custom_call.1} parent=1 // pred_check_branch
      %163 = sbr.rel (0) target = $region17
    $region16: #{tpu_custom_call.1} parent=1 // pred_region
      %164 = dma.done [#allocation3], 128
    $region17: #{tpu_custom_call.1} parent=1 // pred_fallthru
      _
    %165 = vsyncpa [#allocation3], 1

</llo_original>
